<compile_context>
chip_gen: v5e
topology: v5e:2x2
jax: 0.10.0
libtpu: 0.0.40
codegen_flags: <defaults>
</compile_context>

<pallas_src>
import jax
import jax.numpy as jnp
from jax.experimental import pallas as pl
from jax.experimental.pallas import tpu as pltpu


def _round_up(n, m):
    return ((n + m - 1) // m) * m


def _pick_batch_tile(batch):
    """Pick the batch tile TB.

    Big enough to amortize the ~0.35us per-grid-step overhead, small enough to
    (a) leave >=2 grid steps once the batch is large (v7x 2-TC sharding) and
    (b) keep double-buffered f32 x/out tiles + resident weights well under the
    32 MiB scoped-VMEM budget on every generation.
    """
    b8 = _round_up(max(batch, 1), 8)
    if b8 >= 1024:
        return 512                 # >=2 grid steps, ~4 MiB HBM traffic / step
    return min(b8, 512)            # single (possibly partial) tile


def _autoencoder_kernel(x_ref,
                        w1_ref, b1_ref,
                        w23_ref, b23_ref,
                        w4_ref, b4_ref,
                        out_ref):
    """Fused encode+decode on one (TB, D) batch tile.

    3 MXU matmuls (bf16 operands, f32 accumulation) + f32 VPU bias/ReLU.
    Weights/biases are VMEM-resident across all grid steps.
    """
    # Cast x f32 -> bf16 in-kernel (avoids a separate XLA convert pass in HBM).
    x = x_ref[...].astype(jnp.bfloat16)                               # (TB, D)

    # encoder layer 1: D -> H, ReLU
    h = jnp.dot(x, w1_ref[...], preferred_element_type=jnp.float32)  # (TB, H) f32
    h = jnp.maximum(h + b1_ref[...], 0.0)

    # folded encoder-2 + decoder-1: (H -> LAT -> H) collapsed to H -> H, ReLU
    g = jnp.dot(h.astype(jnp.bfloat16), w23_ref[...],
                preferred_element_type=jnp.float32)                   # (TB, H) f32
    g = jnp.maximum(g + b23_ref[...], 0.0)

    # decoder layer 2: H -> D
    y = jnp.dot(g.astype(jnp.bfloat16), w4_ref[...],
                preferred_element_type=jnp.float32)                   # (TB, D) f32
    out_ref[...] = (y + b4_ref[...]).astype(out_ref.dtype)


def prepare_params(params):
    """One-time parameter prep (hoisted out of the per-forward hot path).

    * Fold the two latent-facing linears (no nonlinearity between them):
        w23 = w2 @ w3, b23 = b2 @ w3 + b3     (exact rewrite, done in f32)
    * Cast matmul weights to bf16 (halves resident-weight HBM traffic; the
      MXU still accumulates in f32). Biases stay f32 for the VPU epilogue.
    """
    w1, b1, w2, b2, w3, b3, w4, b4 = params
    w23 = w2 @ w3                              # (H, H)
    b23 = b2 @ w3 + b3                         # (1, H)
    return (w1.astype(jnp.bfloat16), b1,
            w23.astype(jnp.bfloat16), b23,
            w4.astype(jnp.bfloat16), b4)


def autoencoder_forward(x_nchw, prepared_params, *, out_dtype=jnp.float32, tb=None):
    """x_nchw: (B, C, H, W) float32 -> reconstruction (B, C, H, W) out_dtype."""
    B, C, H, W = x_nchw.shape
    D = C * H * W
    x = x_nchw.reshape(B, D)                   # flatten (torch .view(B, -1)); no copy

    w1, b1, w23, b23, w4, b4 = prepared_params
    HID = w1.shape[1]

    TB = tb if tb is not None else _pick_batch_tile(B)
    grid = (pl.cdiv(B, TB),)                   # partial last tile: OOB output rows
                                               # are masked on store by Pallas.

    tile_io = lambda i: (i, 0)                 # x / out: walk the batch axis
    resident = lambda i: (0, 0)                # weights / biases: VMEM-resident

    out = pl.pallas_call(
        _autoencoder_kernel,
        out_shape=jax.ShapeDtypeStruct((B, D), out_dtype),
        grid_spec=pltpu.PrefetchScalarGridSpec(
            num_scalar_prefetch=0,
            grid=grid,
            in_specs=[
                pl.BlockSpec((TB, D), tile_io),          # x tile (pipelined, f32)
                pl.BlockSpec((D, HID), resident),        # w1  (bf16)
                pl.BlockSpec((1, HID), resident),        # b1  (f32)
                pl.BlockSpec((HID, HID), resident),      # w23 (folded, bf16)
                pl.BlockSpec((1, HID), resident),        # b23 (folded, f32)
                pl.BlockSpec((HID, D), resident),        # w4  (bf16)
                pl.BlockSpec((1, D), resident),          # b4  (f32)
            ],
            out_specs=pl.BlockSpec((TB, D), tile_io),
        ),
        compiler_params=pltpu.CompilerParams(
            # Batch axis is embarrassingly parallel (v7x shards it over 2 TCs).
            dimension_semantics=(pltpu.PARALLEL,),
            # Lift v5e's 16 MiB scoped default; 32 MiB is safe on all gens.
            vmem_limit_bytes=32 * 1024 * 1024,
        ),
    )(x, w1, b1, w23, b23, w4, b4)

    return out.reshape(B, C, H, W)


def init_params(key, d_in, hidden, latent):
    """Weights stored (in, out) so kernel computes x @ W + b; bias (1, out)."""
    ks = jax.random.split(key, 4)

    def lin(k, fan_in, fan_out):
        w = jax.random.normal(k, (fan_in, fan_out), dtype=jnp.float32) * (fan_in ** -0.5)
        b = jnp.zeros((1, fan_out), dtype=jnp.float32)
        return w, b

    w1, b1 = lin(ks[0], d_in, hidden)     # encoder layer 1
    w2, b2 = lin(ks[1], hidden, latent)   # encoder layer 2 (to latent)
    w3, b3 = lin(ks[2], latent, hidden)   # decoder layer 1
    w4, b4 = lin(ks[3], hidden, d_in)     # decoder layer 2 (to input dim)
    return (w1, b1, w2, b2, w3, b3, w4, b4)


def _reference_f32(x_nchw, params):
    """Pure-f32, unfolded reference (original module semantics)."""
    B, C, H, W = x_nchw.shape
    x = x_nchw.reshape(B, -1)
    w1, b1, w2, b2, w3, b3, w4, b4 = params
    h = jnp.maximum(x @ w1 + b1, 0.0)
    z = h @ w2 + b2
    g = jnp.maximum(z @ w3 + b3, 0.0)
    x_hat = g @ w4 + b4
    return x_hat.reshape(B, C, H, W)


def _reference_matched(x_nchw, params):
    """Same numerics as the kernel: folded w2@w3, bf16 operands, f32 accumulation."""
    B, C, H, W = x_nchw.shape
    x = x_nchw.reshape(B, -1)
    w1, b1, w2, b2, w3, b3, w4, b4 = params
    w23 = w2 @ w3
    b23 = b2 @ w3 + b3
    h = jnp.dot(x.astype(jnp.bfloat16), w1.astype(jnp.bfloat16),
                preferred_element_type=jnp.float32)
    h = jnp.maximum(h + b1, 0.0)
    g = jnp.dot(h.astype(jnp.bfloat16), w23.astype(jnp.bfloat16),
                preferred_element_type=jnp.float32)
    g = jnp.maximum(g + b23, 0.0)
    y = jnp.dot(g.astype(jnp.bfloat16), w4.astype(jnp.bfloat16),
                preferred_element_type=jnp.float32)
    return (y + b4).reshape(B, C, H, W)


if __name__ == "__main__":
    key = jax.random.PRNGKey(0)
    k_x, k_p = jax.random.split(key)

    B, C, Hs, Ws = 2, 4, 16, 16          # NCHW input
    D = C * Hs * Ws                      # 1024 flattened features
    HIDDEN, LATENT = 128, 32

    x = jax.random.normal(k_x, (B, C, Hs, Ws), dtype=jnp.float32)
    params = init_params(k_p, D, HIDDEN, LATENT)
    prepped = prepare_params(params)     # one-time weight fold + bf16 cast

    # --- small forward (single partial tile) ---
    x_hat = jax.block_until_ready(autoencoder_forward(x, prepped))
    assert x_hat.shape == x.shape and x_hat.dtype == jnp.float32

    ref_m = _reference_matched(x, params)
    assert jnp.allclose(x_hat, ref_m, rtol=2e-2, atol=1e-4), "mismatch vs matched reference"

    ref_f32 = _reference_f32(x, params)
    rel = jnp.linalg.norm(x_hat - ref_f32) / jnp.linalg.norm(ref_f32)
    assert rel < 5e-2, f"bf16 drift too large: {rel}"

    # --- ragged batch: multi-step grid with a masked partial last tile ---
    x2 = jax.random.normal(jax.random.PRNGKey(1), (72, C, Hs, Ws), dtype=jnp.float32)
    x2_hat = jax.block_until_ready(autoencoder_forward(x2, prepped, tb=32))
    ref2 = _reference_matched(x2, params)
    assert jnp.allclose(x2_hat, ref2, rtol=2e-2, atol=1e-4), "partial-tile mismatch"

    print("KERNEL_OK")
</pallas_src>

<mosaic_0001>
module attributes {stable_mosaic.version = 11 : i64} {
  func.func @_autoencoder_kernel(%arg0: i32, %arg1: memref<8x1024xf32, #tpu.memory_space<vmem>>, %arg2: memref<1024x128xbf16, #tpu.memory_space<vmem>>, %arg3: memref<1x128xf32, #tpu.memory_space<vmem>>, %arg4: memref<128x128xbf16, #tpu.memory_space<vmem>>, %arg5: memref<1x128xf32, #tpu.memory_space<vmem>>, %arg6: memref<128x1024xbf16, #tpu.memory_space<vmem>>, %arg7: memref<1x1024xf32, #tpu.memory_space<vmem>>, %arg8: memref<8x1024xf32, #tpu.memory_space<vmem>>) attributes {dimension_semantics = [#tpu.dimension_semantics<parallel>], iteration_bounds = array<i64: 1>, scalar_prefetch = 0 : i64, scratch_operands = 0 : i64, tpu.core_type = #tpu.core_type<tc>, window_params = [{transform_indices = @transform_0, window_bounds = array<i64: 8, 1024>}, {pipeline_mode = #tpu.pipeline_mode<synchronous>, transform_indices = @transform_1, window_bounds = array<i64: 1024, 128>}, {pipeline_mode = #tpu.pipeline_mode<synchronous>, transform_indices = @transform_2, window_bounds = array<i64: 1, 128>}, {pipeline_mode = #tpu.pipeline_mode<synchronous>, transform_indices = @transform_3, window_bounds = array<i64: 128, 128>}, {pipeline_mode = #tpu.pipeline_mode<synchronous>, transform_indices = @transform_4, window_bounds = array<i64: 1, 128>}, {pipeline_mode = #tpu.pipeline_mode<synchronous>, transform_indices = @transform_5, window_bounds = array<i64: 128, 1024>}, {pipeline_mode = #tpu.pipeline_mode<synchronous>, transform_indices = @transform_6, window_bounds = array<i64: 1, 1024>}, {transform_indices = @transform_7, window_bounds = array<i64: 8, 1024>}]} {
    %c0 = arith.constant 0 : index
    %c0_0 = arith.constant 0 : index
    %0 = vector.load %arg1[%c0, %c0_0] : memref<8x1024xf32, #tpu.memory_space<vmem>>, vector<8x1024xf32>
    %1 = arith.truncf %0 : vector<8x1024xf32> to vector<8x1024xbf16>
    %c0_1 = arith.constant 0 : index
    %c0_2 = arith.constant 0 : index
    %2 = vector.load %arg2[%c0_1, %c0_2] : memref<1024x128xbf16, #tpu.memory_space<vmem>>, vector<1024x128xbf16>
    %cst = arith.constant dense<0.000000e+00> : vector<8x128xf32>
    %3 = tpu.matmul %1, %2, %cst {dimension_numbers = #tpu.dot_dimension_numbers<[1], [0], [0], [1], [0, 0, 1, 1], [], []>} : vector<8x1024xbf16>, vector<1024x128xbf16>, vector<8x128xf32> -> vector<8x128xf32>
    %c0_3 = arith.constant 0 : index
    %c0_4 = arith.constant 0 : index
    %4 = vector.load %arg3[%c0_3, %c0_4] : memref<1x128xf32, #tpu.memory_space<vmem>>, vector<1x128xf32>
    %5 = vector.broadcast %4 : vector<1x128xf32> to vector<8x128xf32>
    %6 = arith.addf %3, %5 : vector<8x128xf32>
    %cst_5 = arith.constant 0.000000e+00 : f32
    %7 = vector.broadcast %cst_5 : f32 to vector<8x128xf32>
    %8 = arith.maximumf %6, %7 : vector<8x128xf32>
    %9 = arith.truncf %8 : vector<8x128xf32> to vector<8x128xbf16>
    %c0_6 = arith.constant 0 : index
    %c0_7 = arith.constant 0 : index
    %10 = vector.load %arg4[%c0_6, %c0_7] : memref<128x128xbf16, #tpu.memory_space<vmem>>, vector<128x128xbf16>
    %cst_8 = arith.constant dense<0.000000e+00> : vector<8x128xf32>
    %11 = tpu.matmul %9, %10, %cst_8 {dimension_numbers = #tpu.dot_dimension_numbers<[1], [0], [0], [1], [0, 0, 1, 1], [], []>} : vector<8x128xbf16>, vector<128x128xbf16>, vector<8x128xf32> -> vector<8x128xf32>
    %c0_9 = arith.constant 0 : index
    %c0_10 = arith.constant 0 : index
    %12 = vector.load %arg5[%c0_9, %c0_10] : memref<1x128xf32, #tpu.memory_space<vmem>>, vector<1x128xf32>
    %13 = vector.broadcast %12 : vector<1x128xf32> to vector<8x128xf32>
    %14 = arith.addf %11, %13 : vector<8x128xf32>
    %cst_11 = arith.constant 0.000000e+00 : f32
    %15 = vector.broadcast %cst_11 : f32 to vector<8x128xf32>
    %16 = arith.maximumf %14, %15 : vector<8x128xf32>
    %17 = arith.truncf %16 : vector<8x128xf32> to vector<8x128xbf16>
    %c0_12 = arith.constant 0 : index
    %c0_13 = arith.constant 0 : index
    %18 = vector.load %arg6[%c0_12, %c0_13] : memref<128x1024xbf16, #tpu.memory_space<vmem>>, vector<128x1024xbf16>
    %cst_14 = arith.constant dense<0.000000e+00> : vector<8x1024xf32>
    %19 = tpu.matmul %17, %18, %cst_14 {dimension_numbers = #tpu.dot_dimension_numbers<[1], [0], [0], [1], [0, 0, 1, 1], [], []>} : vector<8x128xbf16>, vector<128x1024xbf16>, vector<8x1024xf32> -> vector<8x1024xf32>
    %c0_15 = arith.constant 0 : index
    %c0_16 = arith.constant 0 : index
    %20 = vector.load %arg7[%c0_15, %c0_16] : memref<1x1024xf32, #tpu.memory_space<vmem>>, vector<1x1024xf32>
    %21 = vector.broadcast %20 : vector<1x1024xf32> to vector<8x1024xf32>
    %22 = arith.addf %19, %21 : vector<8x1024xf32>
    %c0_17 = arith.constant 0 : index
    %c0_18 = arith.constant 0 : index
    %23 = vector.load %arg8[%c0_17, %c0_18] : memref<8x1024xf32, #tpu.memory_space<vmem>>, vector<8x1024xf32>
    tpu.vector_store %arg8[%c0_17, %c0_18], %22 {strides = array<i32>} : memref<8x1024xf32, #tpu.memory_space<vmem>>, vector<8x1024xf32>,
    return
  }
  func.func @transform_0(%arg0: i32) -> (i32, i32) {
    %c0_i32 = arith.constant 0 : i32
    %c0_i32_0 = arith.constant 0 : i32
    return %arg0, %c0_i32 : i32, i32
  }
  func.func @transform_1(%arg0: i32) -> (i32, i32) {
    %c0_i32 = arith.constant 0 : i32
    %c0_i32_0 = arith.constant 0 : i32
    %c0_i32_1 = arith.constant 0 : i32
    return %c0_i32, %c0_i32_0 : i32, i32
  }
  func.func @transform_2(%arg0: i32) -> (i32, i32) {
    %c0_i32 = arith.constant 0 : i32
    %c0_i32_0 = arith.constant 0 : i32
    %c0_i32_1 = arith.constant 0 : i32
    return %c0_i32, %c0_i32_0 : i32, i32
  }
  func.func @transform_3(%arg0: i32) -> (i32, i32) {
    %c0_i32 = arith.constant 0 : i32
    %c0_i32_0 = arith.constant 0 : i32
    %c0_i32_1 = arith.constant 0 : i32
    return %c0_i32, %c0_i32_0 : i32, i32
  }
  func.func @transform_4(%arg0: i32) -> (i32, i32) {
    %c0_i32 = arith.constant 0 : i32
    %c0_i32_0 = arith.constant 0 : i32
    %c0_i32_1 = arith.constant 0 : i32
    return %c0_i32, %c0_i32_0 : i32, i32
  }
  func.func @transform_5(%arg0: i32) -> (i32, i32) {
    %c0_i32 = arith.constant 0 : i32
    %c0_i32_0 = arith.constant 0 : i32
    %c0_i32_1 = arith.constant 0 : i32
    return %c0_i32, %c0_i32_0 : i32, i32
  }
  func.func @transform_6(%arg0: i32) -> (i32, i32) {
    %c0_i32 = arith.constant 0 : i32
    %c0_i32_0 = arith.constant 0 : i32
    %c0_i32_1 = arith.constant 0 : i32
    return %c0_i32, %c0_i32_0 : i32, i32
  }
  func.func @transform_7(%arg0: i32) -> (i32, i32) {
    %c0_i32 = arith.constant 0 : i32
    %c0_i32_0 = arith.constant 0 : i32
    return %arg0, %c0_i32 : i32, i32
  }
}

</mosaic_0001>

<llo_original>
// kernel: tpu_custom_call.1
$region0: #{tpu_custom_call.1}
  #allocation0 [shape = 'u32[]', space=smem, size = 0x4, offset = 0x4, fixed_abs, tag = 'smem constant byte address 0x4 - core index']
  #allocation1 [shape = 'u32[72,128]{1,0:T(1,128)}', space=vmem, size = 0x9000, scoped, tag = 'internal scratch']
  %s0 = inlined_call_operand.hbm [shape: f32[2,1024], index: 0, kind: input, shape index: {}]
  %s1 = inlined_call_operand.hbm [shape: bf16[1024,128], index: 1, kind: input, shape index: {}]
  %s2 = inlined_call_operand.vmem [shape: f32[1,128], index: 2, kind: input, shape index: {}]
  %s3 = inlined_call_operand.hbm [shape: bf16[128,128], index: 3, kind: input, shape index: {}]
  %s4 = inlined_call_operand.vmem [shape: f32[1,128], index: 4, kind: input, shape index: {}]
  %s5 = inlined_call_operand.hbm [shape: bf16[128,1024], index: 5, kind: input, shape index: {}]
  %s6 = inlined_call_operand.hbm [shape: f32[1,1024], index: 6, kind: input, shape index: {}]
  %s7 = inlined_call_operand.hbm [shape: f32[2,1024], index: 7, kind: output, shape index: {}]
  %s8 = sld [smem:[#allocation0]]
  $region58: #{tpu_custom_call.1} parent=0
    _
  %s10 = ssub.s32 1, %s8
  %s11 = scalar_select 0, %s10, %s8
  $region1: #{tpu_custom_call.1} parent=0
    #allocation2 [shape = 'u8[32768]{0}', space=vmem, size = 0x8000, scoped, tag = 'input window, operand 0, single buffered']
    #allocation3 [shape = 's32[1]{0}', space=sflag, size = 0x4, scoped, tag = 'scoped memory for tpu_custom_call.1']
    #allocation4 [shape = 's32[1]{0}', space=sflag, size = 0x4, scoped, tag = 'scoped memory for tpu_custom_call.1']
    #allocation5 [shape = 'u8[262144]{0}', space=vmem, size = 0x40000, scoped, tag = 'input window, operand 1, single buffered']
    #allocation6 [shape = 's32[1]{0}', space=sflag, size = 0x4, scoped, tag = 'scoped memory for tpu_custom_call.1']
    #allocation7 [shape = 'u8[32768]{0}', space=vmem, size = 0x8000, scoped, tag = 'input window, operand 3, single buffered']
    #allocation8 [shape = 'u8[262144]{0}', space=vmem, size = 0x40000, scoped, tag = 'input window, operand 5, single buffered']
    #allocation9 [shape = 's32[1]{0}', space=sflag, size = 0x4, scoped, tag = 'scoped memory for tpu_custom_call.1']
    #allocation10 [shape = 'u8[4096]{0}', space=vmem, size = 0x1000, scoped, tag = 'input window, operand 6, single buffered']
    #allocation11 [shape = 'u8[32768]{0}', space=vmem, size = 0x8000, scoped, tag = 'output window, operand 0, single buffered']
    %12 = vsyncpa [#allocation3], 0
    %13 = vsyncpa [#allocation6], 0
    %14 = vsyncpa [#allocation9], 0
    %15 = vsyncpa [#allocation4], 0
    // Predicated region
    $region2: #{tpu_custom_call.1} parent=1 // pred_check
      _
    $region3: #{tpu_custom_call.1} parent=1 // pred_check_branch
      %17 = sbr.rel (0) target = $region5
    $region4: #{tpu_custom_call.1} parent=1 // pred_region
      %19 = vsyncadd [#allocation3], 768
      %s20 = sshll.u32 %s0, 4
      %s21 = int_to_ptr.hbm [resolvable:$true] %s20
      %s22 = sshll.u32 [#allocation2], 4
      %s23 = int_to_ptr.vmem [resolvable:$true] %s22
      %28 = dma.hbm_to_vmem [thread:$0]  %s21, 256, %s23, [#allocation3], 256, 256, 16
    $region5: #{tpu_custom_call.1} parent=1 // pred_fallthru
      _
    // Predicated region
    $region6: #{tpu_custom_call.1} parent=1 // pred_check
      _
    $region7: #{tpu_custom_call.1} parent=1 // pred_check_branch
      %30 = sbr.rel (0) target = $region9
    $region8: #{tpu_custom_call.1} parent=1 // pred_region
      %32 = vsyncadd [#allocation6], 0
      %s33 = sshll.u32 %s1, 4
      %s34 = int_to_ptr.hbm [resolvable:$true] %s33
      %s35 = sshll.u32 [#allocation5], 4
      %s36 = int_to_ptr.vmem [resolvable:$true] %s35
      %41 = dma.hbm_to_vmem [thread:$0]  %s34, 8192, %s36, [#allocation6], 64, 64, 4
    $region9: #{tpu_custom_call.1} parent=1 // pred_fallthru
      _
    // Predicated region
    $region10: #{tpu_custom_call.1} parent=1 // pred_check
      _
    $region11: #{tpu_custom_call.1} parent=1 // pred_check_branch
      %43 = sbr.rel (0) target = $region13
    $region12: #{tpu_custom_call.1} parent=1 // pred_region
      _
    $region13: #{tpu_custom_call.1} parent=1 // pred_fallthru
      _
    // Predicated region
    $region14: #{tpu_custom_call.1} parent=1 // pred_check
      _
    $region15: #{tpu_custom_call.1} parent=1 // pred_check_branch
      %45 = sbr.rel (0) target = $region17
    $region16: #{tpu_custom_call.1} parent=1 // pred_region
      %47 = vsyncadd [#allocation6], 0
      %s48 = sshll.u32 %s3, 4
      %s49 = int_to_ptr.hbm [resolvable:$true] %s48
      %s50 = sshll.u32 [#allocation7], 4
      %s51 = int_to_ptr.vmem [resolvable:$true] %s50
      %56 = dma.hbm_to_vmem [thread:$0]  %s49, 1024, %s51, [#allocation6], 64, 64, 4
    $region17: #{tpu_custom_call.1} parent=1 // pred_fallthru
      _
    // Predicated region
    $region18: #{tpu_custom_call.1} parent=1 // pred_check
      _
    $region19: #{tpu_custom_call.1} parent=1 // pred_check_branch
      %58 = sbr.rel (0) target = $region21
    $region20: #{tpu_custom_call.1} parent=1 // pred_region
      _
    $region21: #{tpu_custom_call.1} parent=1 // pred_fallthru
      _
    // Predicated region
    $region22: #{tpu_custom_call.1} parent=1 // pred_check
      _
    $region23: #{tpu_custom_call.1} parent=1 // pred_check_branch
      %60 = sbr.rel (0) target = $region25
    $region24: #{tpu_custom_call.1} parent=1 // pred_region
      %62 = vsyncadd [#allocation9], 0
      %s63 = sshll.u32 %s5, 4
      %s64 = int_to_ptr.hbm [resolvable:$true] %s63
      %s65 = sshll.u32 [#allocation8], 4
      %s66 = int_to_ptr.vmem [resolvable:$true] %s65
      %71 = dma.hbm_to_vmem [thread:$0]  %s64, 8192, %s66, [#allocation9], 512, 512, 32
    $region25: #{tpu_custom_call.1} parent=1 // pred_fallthru
      _
    // Predicated region
    $region26: #{tpu_custom_call.1} parent=1 // pred_check
      _
    $region27: #{tpu_custom_call.1} parent=1 // pred_check_branch
      %73 = sbr.rel (0) target = $region29
    $region28: #{tpu_custom_call.1} parent=1 // pred_region
      %75 = vsyncadd [#allocation9], 0
      %s77 = sshll.u32 %s6, 4
      %s78 = int_to_ptr.hbm [resolvable:$true] %s77
      %s79 = sshll.u32 [#allocation10], 4
      %s80 = int_to_ptr.vmem [resolvable:$true] %s79
      %82 = dma.hbm_to_vmem [thread:$0]  %s78, 128, %s80, [#allocation9]
    $region29: #{tpu_custom_call.1} parent=1 // pred_fallthru
      _
    // Predicated region
    $region30: #{tpu_custom_call.1} parent=1 // pred_check
      _
    $region31: #{tpu_custom_call.1} parent=1 // pred_check_branch
      %84 = sbr.rel (0) target = $region33
    $region32: #{tpu_custom_call.1} parent=1 // pred_region
      %86 = dma.done [#allocation3], 1024
    $region33: #{tpu_custom_call.1} parent=1 // pred_fallthru
      _
    // Predicated region
    $region34: #{tpu_custom_call.1} parent=1 // pred_check
      _
    $region35: #{tpu_custom_call.1} parent=1 // pred_check_branch
      %88 = sbr.rel (0) target = $region37
    $region36: #{tpu_custom_call.1} parent=1 // pred_region
      %90 = dma.done [#allocation6], 8192
    $region37: #{tpu_custom_call.1} parent=1 // pred_fallthru
      _
    // Predicated region
    $region38: #{tpu_custom_call.1} parent=1 // pred_check
      _
    $region39: #{tpu_custom_call.1} parent=1 // pred_check_branch
      %92 = sbr.rel (0) target = $region41
    $region40: #{tpu_custom_call.1} parent=1 // pred_region
      %94 = dma.done [#allocation6], 1024
    $region41: #{tpu_custom_call.1} parent=1 // pred_fallthru
      _
    // Predicated region
    $region42: #{tpu_custom_call.1} parent=1 // pred_check
      _
    $region43: #{tpu_custom_call.1} parent=1 // pred_check_branch
      %96 = sbr.rel (0) target = $region45
    $region44: #{tpu_custom_call.1} parent=1 // pred_region
      %98 = dma.done [#allocation9], 8192
    $region45: #{tpu_custom_call.1} parent=1 // pred_fallthru
      _
    // Predicated region
    $region46: #{tpu_custom_call.1} parent=1 // pred_check
      _
    $region47: #{tpu_custom_call.1} parent=1 // pred_check_branch
      %100 = sbr.rel (0) target = $region49
    $region48: #{tpu_custom_call.1} parent=1 // pred_region
      %102 = dma.done [#allocation9], 128
    $region49: #{tpu_custom_call.1} parent=1 // pred_fallthru
      _
    %v103 = vld [vmem:[#allocation2] sm:$0xff]
    %v104 = vld [vmem:[#allocation2 + $0x8] sm:$0xff]
    %v105 = vld [vmem:[#allocation2 + $0x10] sm:$0xff]
    %v106 = vld [vmem:[#allocation2 + $0x18] sm:$0xff]
    %v107 = vld [vmem:[#allocation2 + $0x20] sm:$0xff]
    %v108 = vld [vmem:[#allocation2 + $0x28] sm:$0xff]
    %v109 = vld [vmem:[#allocation2 + $0x30] sm:$0xff]
    %v110 = vld [vmem:[#allocation2 + $0x38] sm:$0xff]
    %119 = vst [vmem:[#allocation1] ss:$4 sm:$0xff] %v103
    %s120 = scalar_lea.vmem [#allocation1], 1
    %121 = vst [vmem:[%s120] ss:$4 sm:$0xff] %v105
    %s122 = scalar_lea.vmem [#allocation1], 2
    %123 = vst [vmem:[%s122] ss:$4 sm:$0xff] %v107
    %s124 = scalar_lea.vmem [#allocation1], 3
    %125 = vst [vmem:[%s124] ss:$4 sm:$0xff] %v109
    %s126 = scalar_lea.vmem [#allocation1], 32
    %127 = vst [vmem:[%s126] ss:$4 sm:$0xff] %v104
    %s128 = scalar_lea.vmem [#allocation1], 33
    %129 = vst [vmem:[%s128] ss:$4 sm:$0xff] %v106
    %s130 = scalar_lea.vmem [#allocation1], 34
    %131 = vst [vmem:[%s130] ss:$4 sm:$0xff] %v108
    %s132 = scalar_lea.vmem [#allocation1], 35
    %133 = vst [vmem:[%s132] ss:$4 sm:$0xff] %v110
    %v134 = vld.sshfl [vmem:[#allocation1] sm:$0xff pattern:$0x73625140]
    %v135 = vld.sshfl [vmem:[#allocation1 + $0x8] sm:$0xff pattern:$0x73625140]
    %v136 = vld.sshfl [vmem:[#allocation1 + $0x10] sm:$0xff pattern:$0x73625140]
    %v137 = vld.sshfl [vmem:[#allocation1 + $0x18] sm:$0xff pattern:$0x73625140]
    %v138 = vld.sshfl [vmem:[#allocation1 + $0x20] sm:$0xff pattern:$0x73625140]
    %v139 = vld.sshfl [vmem:[#allocation1 + $0x28] sm:$0xff pattern:$0x73625140]
    %v140 = vld.sshfl [vmem:[#allocation1 + $0x30] sm:$0xff pattern:$0x73625140]
    %v141 = vld.sshfl [vmem:[#allocation1 + $0x38] sm:$0xff pattern:$0x73625140]
    %v150 = vpack.c.bf16 %v134, %v134
    %v151 = vpack.c.bf16 %v135, %v135
    %v152 = vpack.c.bf16 %v136, %v136
    %v153 = vpack.c.bf16 %v137, %v137
    %v154 = vpack.c.bf16 %v138, %v138
    %v155 = vpack.c.bf16 %v139, %v139
    %v156 = vpack.c.bf16 %v140, %v140
    %v157 = vpack.c.bf16 %v141, %v141
    %v158 = vld [vmem:[#allocation5] sm:$0xf]
    %v159 = vld [vmem:[#allocation5 + $0x4] sm:$0xf]
    %v160 = vld [vmem:[#allocation5 + $0x8] sm:$0xf]
    %v161 = vld [vmem:[#allocation5 + $0xc] sm:$0xf]
    %v162 = vld [vmem:[#allocation5 + $0x10] sm:$0xf]
    %v163 = vld [vmem:[#allocation5 + $0x14] sm:$0xf]
    %v164 = vld [vmem:[#allocation5 + $0x18] sm:$0xf]
    %v165 = vld [vmem:[#allocation5 + $0x1c] sm:$0xf]
    %v166 = vld [vmem:[#allocation5 + $0x20] sm:$0xf]
    %v167 = vld [vmem:[#allocation5 + $0x24] sm:$0xf]
    %v168 = vld [vmem:[#allocation5 + $0x28] sm:$0xf]
    %v169 = vld [vmem:[#allocation5 + $0x2c] sm:$0xf]
    %v170 = vld [vmem:[#allocation5 + $0x30] sm:$0xf]
    %v171 = vld [vmem:[#allocation5 + $0x34] sm:$0xf]
    %v172 = vld [vmem:[#allocation5 + $0x38] sm:$0xf]
    %v173 = vld [vmem:[#allocation5 + $0x3c] sm:$0xf]
    %v174 = vld [vmem:[#allocation5 + $0x40] sm:$0xf]
    %v175 = vld [vmem:[#allocation5 + $0x44] sm:$0xf]
    %v176 = vld [vmem:[#allocation5 + $0x48] sm:$0xf]
    %v177 = vld [vmem:[#allocation5 + $0x4c] sm:$0xf]
    %v178 = vld [vmem:[#allocation5 + $0x50] sm:$0xf]
    %v179 = vld [vmem:[#allocation5 + $0x54] sm:$0xf]
    %v180 = vld [vmem:[#allocation5 + $0x58] sm:$0xf]
    %v181 = vld [vmem:[#allocation5 + $0x5c] sm:$0xf]
    %v182 = vld [vmem:[#allocation5 + $0x60] sm:$0xf]
    %v183 = vld [vmem:[#allocation5 + $0x64] sm:$0xf]
    %v184 = vld [vmem:[#allocation5 + $0x68] sm:$0xf]
    %v185 = vld [vmem:[#allocation5 + $0x6c] sm:$0xf]
    %v186 = vld [vmem:[#allocation5 + $0x70] sm:$0xf]
    %v187 = vld [vmem:[#allocation5 + $0x74] sm:$0xf]
    %v188 = vld [vmem:[#allocation5 + $0x78] sm:$0xf]
    %v189 = vld [vmem:[#allocation5 + $0x7c] sm:$0xf]
    %v190 = vld [vmem:[#allocation5 + $0x80] sm:$0xf]
    %v191 = vld [vmem:[#allocation5 + $0x84] sm:$0xf]
    %v192 = vld [vmem:[#allocation5 + $0x88] sm:$0xf]
    %v193 = vld [vmem:[#allocation5 + $0x8c] sm:$0xf]
    %v194 = vld [vmem:[#allocation5 + $0x90] sm:$0xf]
    %v195 = vld [vmem:[#allocation5 + $0x94] sm:$0xf]
    %v196 = vld [vmem:[#allocation5 + $0x98] sm:$0xf]
    %v197 = vld [vmem:[#allocation5 + $0x9c] sm:$0xf]
    %v198 = vld [vmem:[#allocation5 + $0xa0] sm:$0xf]
    %v199 = vld [vmem:[#allocation5 + $0xa4] sm:$0xf]
    %v200 = vld [vmem:[#allocation5 + $0xa8] sm:$0xf]
    %v201 = vld [vmem:[#allocation5 + $0xac] sm:$0xf]
    %v202 = vld [vmem:[#allocation5 + $0xb0] sm:$0xf]
    %v203 = vld [vmem:[#allocation5 + $0xb4] sm:$0xf]
    %v204 = vld [vmem:[#allocation5 + $0xb8] sm:$0xf]
    %v205 = vld [vmem:[#allocation5 + $0xbc] sm:$0xf]
    %v206 = vld [vmem:[#allocation5 + $0xc0] sm:$0xf]
    %v207 = vld [vmem:[#allocation5 + $0xc4] sm:$0xf]
    %v208 = vld [vmem:[#allocation5 + $0xc8] sm:$0xf]
    %v209 = vld [vmem:[#allocation5 + $0xcc] sm:$0xf]
    %v210 = vld [vmem:[#allocation5 + $0xd0] sm:$0xf]
    %v211 = vld [vmem:[#allocation5 + $0xd4] sm:$0xf]
    %v212 = vld [vmem:[#allocation5 + $0xd8] sm:$0xf]
    %v213 = vld [vmem:[#allocation5 + $0xdc] sm:$0xf]
    %v214 = vld [vmem:[#allocation5 + $0xe0] sm:$0xf]
    %v215 = vld [vmem:[#allocation5 + $0xe4] sm:$0xf]
    %v216 = vld [vmem:[#allocation5 + $0xe8] sm:$0xf]
    %v217 = vld [vmem:[#allocation5 + $0xec] sm:$0xf]
    %v218 = vld [vmem:[#allocation5 + $0xf0] sm:$0xf]
    %v219 = vld [vmem:[#allocation5 + $0xf4] sm:$0xf]
    %v220 = vld [vmem:[#allocation5 + $0xf8] sm:$0xf]
    %v221 = vld [vmem:[#allocation5 + $0xfc] sm:$0xf]
    %v222 = vld [vmem:[#allocation5 + $0x100] sm:$0xf]
    %v223 = vld [vmem:[#allocation5 + $0x104] sm:$0xf]
    %v224 = vld [vmem:[#allocation5 + $0x108] sm:$0xf]
    %v225 = vld [vmem:[#allocation5 + $0x10c] sm:$0xf]
    %v226 = vld [vmem:[#allocation5 + $0x110] sm:$0xf]
    %v227 = vld [vmem:[#allocation5 + $0x114] sm:$0xf]
    %v228 = vld [vmem:[#allocation5 + $0x118] sm:$0xf]
    %v229 = vld [vmem:[#allocation5 + $0x11c] sm:$0xf]
    %v230 = vld [vmem:[#allocation5 + $0x120] sm:$0xf]
    %v231 = vld [vmem:[#allocation5 + $0x124] sm:$0xf]
    %v232 = vld [vmem:[#allocation5 + $0x128] sm:$0xf]
    %v233 = vld [vmem:[#allocation5 + $0x12c] sm:$0xf]
    %v234 = vld [vmem:[#allocation5 + $0x130] sm:$0xf]
    %v235 = vld [vmem:[#allocation5 + $0x134] sm:$0xf]
    %v236 = vld [vmem:[#allocation5 + $0x138] sm:$0xf]
    %v237 = vld [vmem:[#allocation5 + $0x13c] sm:$0xf]
    %v238 = vld [vmem:[#allocation5 + $0x140] sm:$0xf]
    %v239 = vld [vmem:[#allocation5 + $0x144] sm:$0xf]
    %v240 = vld [vmem:[#allocation5 + $0x148] sm:$0xf]
    %v241 = vld [vmem:[#allocation5 + $0x14c] sm:$0xf]
    %v242 = vld [vmem:[#allocation5 + $0x150] sm:$0xf]
    %v243 = vld [vmem:[#allocation5 + $0x154] sm:$0xf]
    %v244 = vld [vmem:[#allocation5 + $0x158] sm:$0xf]
    %v245 = vld [vmem:[#allocation5 + $0x15c] sm:$0xf]
    %v246 = vld [vmem:[#allocation5 + $0x160] sm:$0xf]
    %v247 = vld [vmem:[#allocation5 + $0x164] sm:$0xf]
    %v248 = vld [vmem:[#allocation5 + $0x168] sm:$0xf]
    %v249 = vld [vmem:[#allocation5 + $0x16c] sm:$0xf]
    %v250 = vld [vmem:[#allocation5 + $0x170] sm:$0xf]
    %v251 = vld [vmem:[#allocation5 + $0x174] sm:$0xf]
    %v252 = vld [vmem:[#allocation5 + $0x178] sm:$0xf]
    %v253 = vld [vmem:[#allocation5 + $0x17c] sm:$0xf]
    %v254 = vld [vmem:[#allocation5 + $0x180] sm:$0xf]
    %v255 = vld [vmem:[#allocation5 + $0x184] sm:$0xf]
    %v256 = vld [vmem:[#allocation5 + $0x188] sm:$0xf]
    %v257 = vld [vmem:[#allocation5 + $0x18c] sm:$0xf]
    %v258 = vld [vmem:[#allocation5 + $0x190] sm:$0xf]
    %v259 = vld [vmem:[#allocation5 + $0x194] sm:$0xf]
    %v260 = vld [vmem:[#allocation5 + $0x198] sm:$0xf]
    %v261 = vld [vmem:[#allocation5 + $0x19c] sm:$0xf]
    %v262 = vld [vmem:[#allocation5 + $0x1a0] sm:$0xf]
    %v263 = vld [vmem:[#allocation5 + $0x1a4] sm:$0xf]
    %v264 = vld [vmem:[#allocation5 + $0x1a8] sm:$0xf]
    %v265 = vld [vmem:[#allocation5 + $0x1ac] sm:$0xf]
    %v266 = vld [vmem:[#allocation5 + $0x1b0] sm:$0xf]
    %v267 = vld [vmem:[#allocation5 + $0x1b4] sm:$0xf]
    %v268 = vld [vmem:[#allocation5 + $0x1b8] sm:$0xf]
    %v269 = vld [vmem:[#allocation5 + $0x1bc] sm:$0xf]
    %v270 = vld [vmem:[#allocation5 + $0x1c0] sm:$0xf]
    %v271 = vld [vmem:[#allocation5 + $0x1c4] sm:$0xf]
    %v272 = vld [vmem:[#allocation5 + $0x1c8] sm:$0xf]
    %v273 = vld [vmem:[#allocation5 + $0x1cc] sm:$0xf]
    %v274 = vld [vmem:[#allocation5 + $0x1d0] sm:$0xf]
    %v275 = vld [vmem:[#allocation5 + $0x1d4] sm:$0xf]
    %v276 = vld [vmem:[#allocation5 + $0x1d8] sm:$0xf]
    %v277 = vld [vmem:[#allocation5 + $0x1dc] sm:$0xf]
    %v278 = vld [vmem:[#allocation5 + $0x1e0] sm:$0xf]
    %v279 = vld [vmem:[#allocation5 + $0x1e4] sm:$0xf]
    %v280 = vld [vmem:[#allocation5 + $0x1e8] sm:$0xf]
    %v281 = vld [vmem:[#allocation5 + $0x1ec] sm:$0xf]
    %v282 = vld [vmem:[#allocation5 + $0x1f0] sm:$0xf]
    %v283 = vld [vmem:[#allocation5 + $0x1f4] sm:$0xf]
    %v284 = vld [vmem:[#allocation5 + $0x1f8] sm:$0xf]
    %v285 = vld [vmem:[#allocation5 + $0x1fc] sm:$0xf]
    %v286 = vld [vmem:[%s2] sm:$0x1]
    %v288 = vperm.slane %v286, 0
    %v418 = vunpack.c.l.b16 %v158
    %v419 = vunpack.c.l.b16 %v159
    %v420 = vunpack.c.l.b16 %v160
    %v421 = vunpack.c.l.b16 %v161
    %v422 = vunpack.c.l.b16 %v162
    %v423 = vunpack.c.l.b16 %v163
    %v424 = vunpack.c.l.b16 %v164
    %v425 = vunpack.c.l.b16 %v165
    %v426 = vunpack.c.l.b16 %v166
    %v427 = vunpack.c.l.b16 %v167
    %v428 = vunpack.c.l.b16 %v168
    %v429 = vunpack.c.l.b16 %v169
    %v430 = vunpack.c.l.b16 %v170
    %v431 = vunpack.c.l.b16 %v171
    %v432 = vunpack.c.l.b16 %v172
    %v433 = vunpack.c.l.b16 %v173
    %v434 = vunpack.c.l.b16 %v174
    %v435 = vunpack.c.l.b16 %v175
    %v436 = vunpack.c.l.b16 %v176
    %v437 = vunpack.c.l.b16 %v177
    %v438 = vunpack.c.l.b16 %v178
    %v439 = vunpack.c.l.b16 %v179
    %v440 = vunpack.c.l.b16 %v180
    %v441 = vunpack.c.l.b16 %v181
    %v442 = vunpack.c.l.b16 %v182
    %v443 = vunpack.c.l.b16 %v183
    %v444 = vunpack.c.l.b16 %v184
    %v445 = vunpack.c.l.b16 %v185
    %v446 = vunpack.c.l.b16 %v186
    %v447 = vunpack.c.l.b16 %v187
    %v448 = vunpack.c.l.b16 %v188
    %v449 = vunpack.c.l.b16 %v189
    %v450 = vunpack.c.l.b16 %v190
    %v451 = vunpack.c.l.b16 %v191
    %v452 = vunpack.c.l.b16 %v192
    %v453 = vunpack.c.l.b16 %v193
    %v454 = vunpack.c.l.b16 %v194
    %v455 = vunpack.c.l.b16 %v195
    %v456 = vunpack.c.l.b16 %v196
    %v457 = vunpack.c.l.b16 %v197
    %v458 = vunpack.c.l.b16 %v198
    %v459 = vunpack.c.l.b16 %v199
    %v460 = vunpack.c.l.b16 %v200
    %v461 = vunpack.c.l.b16 %v201
    %v462 = vunpack.c.l.b16 %v202
    %v463 = vunpack.c.l.b16 %v203
    %v464 = vunpack.c.l.b16 %v204
    %v465 = vunpack.c.l.b16 %v205
    %v466 = vunpack.c.l.b16 %v206
    %v467 = vunpack.c.l.b16 %v207
    %v468 = vunpack.c.l.b16 %v208
    %v469 = vunpack.c.l.b16 %v209
    %v470 = vunpack.c.l.b16 %v210
    %v471 = vunpack.c.l.b16 %v211
    %v472 = vunpack.c.l.b16 %v212
    %v473 = vunpack.c.l.b16 %v213
    %v474 = vunpack.c.l.b16 %v214
    %v475 = vunpack.c.l.b16 %v215
    %v476 = vunpack.c.l.b16 %v216
    %v477 = vunpack.c.l.b16 %v217
    %v478 = vunpack.c.l.b16 %v218
    %v479 = vunpack.c.l.b16 %v219
    %v480 = vunpack.c.l.b16 %v220
    %v481 = vunpack.c.l.b16 %v221
    %v482 = vunpack.c.l.b16 %v222
    %v483 = vunpack.c.l.b16 %v223
    %v484 = vunpack.c.l.b16 %v224
    %v485 = vunpack.c.l.b16 %v225
    %v486 = vunpack.c.l.b16 %v226
    %v487 = vunpack.c.l.b16 %v227
    %v488 = vunpack.c.l.b16 %v228
    %v489 = vunpack.c.l.b16 %v229
    %v490 = vunpack.c.l.b16 %v230
    %v491 = vunpack.c.l.b16 %v231
    %v492 = vunpack.c.l.b16 %v232
    %v493 = vunpack.c.l.b16 %v233
    %v494 = vunpack.c.l.b16 %v234
    %v495 = vunpack.c.l.b16 %v235
    %v496 = vunpack.c.l.b16 %v236
    %v497 = vunpack.c.l.b16 %v237
    %v498 = vunpack.c.l.b16 %v238
    %v499 = vunpack.c.l.b16 %v239
    %v500 = vunpack.c.l.b16 %v240
    %v501 = vunpack.c.l.b16 %v241
    %v502 = vunpack.c.l.b16 %v242
    %v503 = vunpack.c.l.b16 %v243
    %v504 = vunpack.c.l.b16 %v244
    %v505 = vunpack.c.l.b16 %v245
    %v506 = vunpack.c.l.b16 %v246
    %v507 = vunpack.c.l.b16 %v247
    %v508 = vunpack.c.l.b16 %v248
    %v509 = vunpack.c.l.b16 %v249
    %v510 = vunpack.c.l.b16 %v250
    %v511 = vunpack.c.l.b16 %v251
    %v512 = vunpack.c.l.b16 %v252
    %v513 = vunpack.c.l.b16 %v253
    %v514 = vunpack.c.l.b16 %v254
    %v515 = vunpack.c.l.b16 %v255
    %v516 = vunpack.c.l.b16 %v256
    %v517 = vunpack.c.l.b16 %v257
    %v518 = vunpack.c.l.b16 %v258
    %v519 = vunpack.c.l.b16 %v259
    %v520 = vunpack.c.l.b16 %v260
    %v521 = vunpack.c.l.b16 %v261
    %v522 = vunpack.c.l.b16 %v262
    %v523 = vunpack.c.l.b16 %v263
    %v524 = vunpack.c.l.b16 %v264
    %v525 = vunpack.c.l.b16 %v265
    %v526 = vunpack.c.l.b16 %v266
    %v527 = vunpack.c.l.b16 %v267
    %v528 = vunpack.c.l.b16 %v268
    %v529 = vunpack.c.l.b16 %v269
    %v530 = vunpack.c.l.b16 %v270
    %v531 = vunpack.c.l.b16 %v271
    %v532 = vunpack.c.l.b16 %v272
    %v533 = vunpack.c.l.b16 %v273
    %v534 = vunpack.c.l.b16 %v274
    %v535 = vunpack.c.l.b16 %v275
    %v536 = vunpack.c.l.b16 %v276
    %v537 = vunpack.c.l.b16 %v277
    %v538 = vunpack.c.l.b16 %v278
    %v539 = vunpack.c.l.b16 %v279
    %v540 = vunpack.c.l.b16 %v280
    %v541 = vunpack.c.l.b16 %v281
    %v542 = vunpack.c.l.b16 %v282
    %v543 = vunpack.c.l.b16 %v283
    %v544 = vunpack.c.l.b16 %v284
    %v545 = vunpack.c.l.b16 %v285
    %v546 = vpack.c.b16 %v419, %v418
    %v547 = vpack.c.b16 %v421, %v420
    %v548 = vpack.c.b16 %v423, %v422
    %v549 = vpack.c.b16 %v425, %v424
    %v550 = vpack.c.b16 %v427, %v426
    %v551 = vpack.c.b16 %v429, %v428
    %v552 = vpack.c.b16 %v431, %v430
    %v553 = vpack.c.b16 %v433, %v432
    %v554 = vpack.c.b16 %v435, %v434
    %v555 = vpack.c.b16 %v437, %v436
    %v556 = vpack.c.b16 %v439, %v438
    %v557 = vpack.c.b16 %v441, %v440
    %v558 = vpack.c.b16 %v443, %v442
    %v559 = vpack.c.b16 %v445, %v444
    %v560 = vpack.c.b16 %v447, %v446
    %v561 = vpack.c.b16 %v449, %v448
    %v562 = vpack.c.b16 %v451, %v450
    %v563 = vpack.c.b16 %v453, %v452
    %v564 = vpack.c.b16 %v455, %v454
    %v565 = vpack.c.b16 %v457, %v456
    %v566 = vpack.c.b16 %v459, %v458
    %v567 = vpack.c.b16 %v461, %v460
    %v568 = vpack.c.b16 %v463, %v462
    %v569 = vpack.c.b16 %v465, %v464
    %v570 = vpack.c.b16 %v467, %v466
    %v571 = vpack.c.b16 %v469, %v468
    %v572 = vpack.c.b16 %v471, %v470
    %v573 = vpack.c.b16 %v473, %v472
    %v574 = vpack.c.b16 %v475, %v474
    %v575 = vpack.c.b16 %v477, %v476
    %v576 = vpack.c.b16 %v479, %v478
    %v577 = vpack.c.b16 %v481, %v480
    %v578 = vpack.c.b16 %v483, %v482
    %v579 = vpack.c.b16 %v485, %v484
    %v580 = vpack.c.b16 %v487, %v486
    %v581 = vpack.c.b16 %v489, %v488
    %v582 = vpack.c.b16 %v491, %v490
    %v583 = vpack.c.b16 %v493, %v492
    %v584 = vpack.c.b16 %v495, %v494
    %v585 = vpack.c.b16 %v497, %v496
    %v586 = vpack.c.b16 %v499, %v498
    %v587 = vpack.c.b16 %v501, %v500
    %v588 = vpack.c.b16 %v503, %v502
    %v589 = vpack.c.b16 %v505, %v504
    %v590 = vpack.c.b16 %v507, %v506
    %v591 = vpack.c.b16 %v509, %v508
    %v592 = vpack.c.b16 %v511, %v510
    %v593 = vpack.c.b16 %v513, %v512
    %v594 = vpack.c.b16 %v515, %v514
    %v595 = vpack.c.b16 %v517, %v516
    %v596 = vpack.c.b16 %v519, %v518
    %v597 = vpack.c.b16 %v521, %v520
    %v598 = vpack.c.b16 %v523, %v522
    %v599 = vpack.c.b16 %v525, %v524
    %v600 = vpack.c.b16 %v527, %v526
    %v601 = vpack.c.b16 %v529, %v528
    %v602 = vpack.c.b16 %v531, %v530
    %v603 = vpack.c.b16 %v533, %v532
    %v604 = vpack.c.b16 %v535, %v534
    %v605 = vpack.c.b16 %v537, %v536
    %v606 = vpack.c.b16 %v539, %v538
    %v607 = vpack.c.b16 %v541, %v540
    %v608 = vpack.c.b16 %v543, %v542
    %v609 = vpack.c.b16 %v545, %v544
    %674 = vmatpush.bf16.msra.mxu0 %v553
    %675 = vmatpush.bf16.msra.mxu0 %v552
    %676 = vmatpush.bf16.msra.mxu0 %v551
    %677 = vmatpush.bf16.msra.mxu0 %v550
    %678 = vmatpush.bf16.msra.mxu0 %v549
    %679 = vmatpush.bf16.msra.mxu0 %v548
    %680 = vmatpush.bf16.msra.mxu0 %v547
    %681 = vmatpush.bf16.msra.mxu0 %v546
    %682 = vmatmul.bf16.gmra.mxu0 %v150
    %v683 = vpop.f32.mrf.mxu0
    %v684 = vadd.f32 %v288, %v683
    %v685 = vpop.f32.mrf.mxu0
    %686 = vdwg.mxu0
    %687 = vmatpush.bf16.msra.mxu0 %v561
    %688 = vmatpush.bf16.msra.mxu0 %v560
    %689 = vmatpush.bf16.msra.mxu0 %v559
    %690 = vmatpush.bf16.msra.mxu0 %v558
    %691 = vmatpush.bf16.msra.mxu0 %v557
    %692 = vmatpush.bf16.msra.mxu0 %v556
    %693 = vmatpush.bf16.msra.mxu0 %v555
    %694 = vmatpush.bf16.msra.mxu0 %v554
    %695 = vmatmul.bf16.gmra.mxu0 %v151
    %v696 = vpop.f32.mrf.mxu0
    %v697 = vadd.f32 %v684, %v696
    %v698 = vpop.f32.mrf.mxu0
    %699 = vdwg.mxu0
    %700 = vmatpush.bf16.msra.mxu0 %v569
    %701 = vmatpush.bf16.msra.mxu0 %v568
    %702 = vmatpush.bf16.msra.mxu0 %v567
    %703 = vmatpush.bf16.msra.mxu0 %v566
    %704 = vmatpush.bf16.msra.mxu0 %v565
    %705 = vmatpush.bf16.msra.mxu0 %v564
    %706 = vmatpush.bf16.msra.mxu0 %v563
    %707 = vmatpush.bf16.msra.mxu0 %v562
    %708 = vmatmul.bf16.gmra.mxu0 %v152
    %v709 = vpop.f32.mrf.mxu0
    %v710 = vadd.f32 %v697, %v709
    %v711 = vpop.f32.mrf.mxu0
    %712 = vdwg.mxu0
    %713 = vmatpush.bf16.msra.mxu0 %v577
    %714 = vmatpush.bf16.msra.mxu0 %v576
    %715 = vmatpush.bf16.msra.mxu0 %v575
    %716 = vmatpush.bf16.msra.mxu0 %v574
    %717 = vmatpush.bf16.msra.mxu0 %v573
    %718 = vmatpush.bf16.msra.mxu0 %v572
    %719 = vmatpush.bf16.msra.mxu0 %v571
    %720 = vmatpush.bf16.msra.mxu0 %v570
    %721 = vmatmul.bf16.gmra.mxu0 %v153
    %v722 = vpop.f32.mrf.mxu0
    %v723 = vadd.f32 %v710, %v722
    %v724 = vpop.f32.mrf.mxu0
    %725 = vdwg.mxu0
    %726 = vmatpush.bf16.msra.mxu0 %v585
    %727 = vmatpush.bf16.msra.mxu0 %v584
    %728 = vmatpush.bf16.msra.mxu0 %v583
    %729 = vmatpush.bf16.msra.mxu0 %v582
    %730 = vmatpush.bf16.msra.mxu0 %v581
    %731 = vmatpush.bf16.msra.mxu0 %v580
    %732 = vmatpush.bf16.msra.mxu0 %v579
    %733 = vmatpush.bf16.msra.mxu0 %v578
    %734 = vmatmul.bf16.gmra.mxu0 %v154
    %v735 = vpop.f32.mrf.mxu0
    %v736 = vadd.f32 %v723, %v735
    %v737 = vpop.f32.mrf.mxu0
    %738 = vdwg.mxu0
    %739 = vmatpush.bf16.msra.mxu0 %v593
    %740 = vmatpush.bf16.msra.mxu0 %v592
    %741 = vmatpush.bf16.msra.mxu0 %v591
    %742 = vmatpush.bf16.msra.mxu0 %v590
    %743 = vmatpush.bf16.msra.mxu0 %v589
    %744 = vmatpush.bf16.msra.mxu0 %v588
    %745 = vmatpush.bf16.msra.mxu0 %v587
    %746 = vmatpush.bf16.msra.mxu0 %v586
    %747 = vmatmul.bf16.gmra.mxu0 %v155
    %v748 = vpop.f32.mrf.mxu0
    %v749 = vadd.f32 %v736, %v748
    %v750 = vpop.f32.mrf.mxu0
    %751 = vdwg.mxu0
    %752 = vmatpush.bf16.msra.mxu0 %v601
    %753 = vmatpush.bf16.msra.mxu0 %v600
    %754 = vmatpush.bf16.msra.mxu0 %v599
    %755 = vmatpush.bf16.msra.mxu0 %v598
    %756 = vmatpush.bf16.msra.mxu0 %v597
    %757 = vmatpush.bf16.msra.mxu0 %v596
    %758 = vmatpush.bf16.msra.mxu0 %v595
    %759 = vmatpush.bf16.msra.mxu0 %v594
    %760 = vmatmul.bf16.gmra.mxu0 %v156
    %v761 = vpop.f32.mrf.mxu0
    %v762 = vadd.f32 %v749, %v761
    %v763 = vpop.f32.mrf.mxu0
    %764 = vdwg.mxu0
    %765 = vmatpush.bf16.msra.mxu0 %v609
    %766 = vmatpush.bf16.msra.mxu0 %v608
    %767 = vmatpush.bf16.msra.mxu0 %v607
    %768 = vmatpush.bf16.msra.mxu0 %v606
    %769 = vmatpush.bf16.msra.mxu0 %v605
    %770 = vmatpush.bf16.msra.mxu0 %v604
    %771 = vmatpush.bf16.msra.mxu0 %v603
    %772 = vmatpush.bf16.msra.mxu0 %v602
    %773 = vmatmul.bf16.gmra.mxu0 %v157
    %v774 = vpop.f32.mrf.mxu0
    %v775 = vadd.f32 %v762, %v774
    %v776 = vpop.f32.mrf.mxu0
    %777 = vdwg.mxu0
    %v778 = vmax.f32 %v775, 0.0
    %v779 = vpack.c.bf16 %v778, %v778
    %v780 = vld [vmem:[#allocation7] sm:$0xf]
    %v781 = vld [vmem:[#allocation7 + $0x4] sm:$0xf]
    %v782 = vld [vmem:[#allocation7 + $0x8] sm:$0xf]
    %v783 = vld [vmem:[#allocation7 + $0xc] sm:$0xf]
    %v784 = vld [vmem:[#allocation7 + $0x10] sm:$0xf]
    %v785 = vld [vmem:[#allocation7 + $0x14] sm:$0xf]
    %v786 = vld [vmem:[#allocation7 + $0x18] sm:$0xf]
    %v787 = vld [vmem:[#allocation7 + $0x1c] sm:$0xf]
    %v788 = vld [vmem:[#allocation7 + $0x20] sm:$0xf]
    %v789 = vld [vmem:[#allocation7 + $0x24] sm:$0xf]
    %v790 = vld [vmem:[#allocation7 + $0x28] sm:$0xf]
    %v791 = vld [vmem:[#allocation7 + $0x2c] sm:$0xf]
    %v792 = vld [vmem:[#allocation7 + $0x30] sm:$0xf]
    %v793 = vld [vmem:[#allocation7 + $0x34] sm:$0xf]
    %v794 = vld [vmem:[#allocation7 + $0x38] sm:$0xf]
    %v795 = vld [vmem:[#allocation7 + $0x3c] sm:$0xf]
    %v796 = vld [vmem:[%s4] sm:$0x1]
    %v798 = vperm.slane %v796, 0
    %v816 = vunpack.c.l.b16 %v780
    %v817 = vunpack.c.l.b16 %v781
    %v818 = vunpack.c.l.b16 %v782
    %v819 = vunpack.c.l.b16 %v783
    %v820 = vunpack.c.l.b16 %v784
    %v821 = vunpack.c.l.b16 %v785
    %v822 = vunpack.c.l.b16 %v786
    %v823 = vunpack.c.l.b16 %v787
    %v824 = vunpack.c.l.b16 %v788
    %v825 = vunpack.c.l.b16 %v789
    %v826 = vunpack.c.l.b16 %v790
    %v827 = vunpack.c.l.b16 %v791
    %v828 = vunpack.c.l.b16 %v792
    %v829 = vunpack.c.l.b16 %v793
    %v830 = vunpack.c.l.b16 %v794
    %v831 = vunpack.c.l.b16 %v795
    %v832 = vpack.c.b16 %v817, %v816
    %v833 = vpack.c.b16 %v819, %v818
    %v834 = vpack.c.b16 %v821, %v820
    %v835 = vpack.c.b16 %v823, %v822
    %v836 = vpack.c.b16 %v825, %v824
    %v837 = vpack.c.b16 %v827, %v826
    %v838 = vpack.c.b16 %v829, %v828
    %v839 = vpack.c.b16 %v831, %v830
    %848 = vmatpush.bf16.msra.mxu0 %v839
    %849 = vmatpush.bf16.msra.mxu0 %v838
    %850 = vmatpush.bf16.msra.mxu0 %v837
    %851 = vmatpush.bf16.msra.mxu0 %v836
    %852 = vmatpush.bf16.msra.mxu0 %v835
    %853 = vmatpush.bf16.msra.mxu0 %v834
    %854 = vmatpush.bf16.msra.mxu0 %v833
    %855 = vmatpush.bf16.msra.mxu0 %v832
    %856 = vmatmul.bf16.gmra.mxu0 %v779
    %v857 = vpop.f32.mrf.mxu0
    %v858 = vadd.f32 %v798, %v857
    %v859 = vpop.f32.mrf.mxu0
    %860 = vdwg.mxu0
    %v861 = vmax.f32 %v858, 0.0
    %v862 = vpack.c.bf16 %v861, %v861
    %v863 = vld [vmem:[#allocation8] sm:$0xff]
    %v864 = vld [vmem:[#allocation8 + $0x8] sm:$0xff]
    %v865 = vld [vmem:[#allocation8 + $0x10] sm:$0xff]
    %v866 = vld [vmem:[#allocation8 + $0x18] sm:$0xff]
    %v867 = vld [vmem:[#allocation8 + $0x20] sm:$0xff]
    %v868 = vld [vmem:[#allocation8 + $0x28] sm:$0xff]
    %v869 = vld [vmem:[#allocation8 + $0x30] sm:$0xff]
    %v870 = vld [vmem:[#allocation8 + $0x38] sm:$0xff]
    %v871 = vld [vmem:[#allocation8 + $0x40] sm:$0xff]
    %v872 = vld [vmem:[#allocation8 + $0x48] sm:$0xff]
    %v873 = vld [vmem:[#allocation8 + $0x50] sm:$0xff]
    %v874 = vld [vmem:[#allocation8 + $0x58] sm:$0xff]
    %v875 = vld [vmem:[#allocation8 + $0x60] sm:$0xff]
    %v876 = vld [vmem:[#allocation8 + $0x68] sm:$0xff]
    %v877 = vld [vmem:[#allocation8 + $0x70] sm:$0xff]
    %v878 = vld [vmem:[#allocation8 + $0x78] sm:$0xff]
    %v879 = vld [vmem:[#allocation8 + $0x80] sm:$0xff]
    %v880 = vld [vmem:[#allocation8 + $0x88] sm:$0xff]
    %v881 = vld [vmem:[#allocation8 + $0x90] sm:$0xff]
    %v882 = vld [vmem:[#allocation8 + $0x98] sm:$0xff]
    %v883 = vld [vmem:[#allocation8 + $0xa0] sm:$0xff]
    %v884 = vld [vmem:[#allocation8 + $0xa8] sm:$0xff]
    %v885 = vld [vmem:[#allocation8 + $0xb0] sm:$0xff]
    %v886 = vld [vmem:[#allocation8 + $0xb8] sm:$0xff]
    %v887 = vld [vmem:[#allocation8 + $0xc0] sm:$0xff]
    %v888 = vld [vmem:[#allocation8 + $0xc8] sm:$0xff]
    %v889 = vld [vmem:[#allocation8 + $0xd0] sm:$0xff]
    %v890 = vld [vmem:[#allocation8 + $0xd8] sm:$0xff]
    %v891 = vld [vmem:[#allocation8 + $0xe0] sm:$0xff]
    %v892 = vld [vmem:[#allocation8 + $0xe8] sm:$0xff]
    %v893 = vld [vmem:[#allocation8 + $0xf0] sm:$0xff]
    %v894 = vld [vmem:[#allocation8 + $0xf8] sm:$0xff]
    %v895 = vld [vmem:[#allocation8 + $0x100] sm:$0xff]
    %v896 = vld [vmem:[#allocation8 + $0x108] sm:$0xff]
    %v897 = vld [vmem:[#allocation8 + $0x110] sm:$0xff]
    %v898 = vld [vmem:[#allocation8 + $0x118] sm:$0xff]
    %v899 = vld [vmem:[#allocation8 + $0x120] sm:$0xff]
    %v900 = vld [vmem:[#allocation8 + $0x128] sm:$0xff]
    %v901 = vld [vmem:[#allocation8 + $0x130] sm:$0xff]
    %v902 = vld [vmem:[#allocation8 + $0x138] sm:$0xff]
    %v903 = vld [vmem:[#allocation8 + $0x140] sm:$0xff]
    %v904 = vld [vmem:[#allocation8 + $0x148] sm:$0xff]
    %v905 = vld [vmem:[#allocation8 + $0x150] sm:$0xff]
    %v906 = vld [vmem:[#allocation8 + $0x158] sm:$0xff]
    %v907 = vld [vmem:[#allocation8 + $0x160] sm:$0xff]
    %v908 = vld [vmem:[#allocation8 + $0x168] sm:$0xff]
    %v909 = vld [vmem:[#allocation8 + $0x170] sm:$0xff]
    %v910 = vld [vmem:[#allocation8 + $0x178] sm:$0xff]
    %v911 = vld [vmem:[#allocation8 + $0x180] sm:$0xff]
    %v912 = vld [vmem:[#allocation8 + $0x188] sm:$0xff]
    %v913 = vld [vmem:[#allocation8 + $0x190] sm:$0xff]
    %v914 = vld [vmem:[#allocation8 + $0x198] sm:$0xff]
    %v915 = vld [vmem:[#allocation8 + $0x1a0] sm:$0xff]
    %v916 = vld [vmem:[#allocation8 + $0x1a8] sm:$0xff]
    %v917 = vld [vmem:[#allocation8 + $0x1b0] sm:$0xff]
    %v918 = vld [vmem:[#allocation8 + $0x1b8] sm:$0xff]
    %v919 = vld [vmem:[#allocation8 + $0x1c0] sm:$0xff]
    %v920 = vld [vmem:[#allocation8 + $0x1c8] sm:$0xff]
    %v921 = vld [vmem:[#allocation8 + $0x1d0] sm:$0xff]
    %v922 = vld [vmem:[#allocation8 + $0x1d8] sm:$0xff]
    %v923 = vld [vmem:[#allocation8 + $0x1e0] sm:$0xff]
    %v924 = vld [vmem:[#allocation8 + $0x1e8] sm:$0xff]
    %v925 = vld [vmem:[#allocation8 + $0x1f0] sm:$0xff]
    %v926 = vld [vmem:[#allocation8 + $0x1f8] sm:$0xff]
    %v927 = vld [vmem:[#allocation10] sm:$0xff]
    %v929 = vperm.slane %v927, 0
    %v930 = vperm.slane %v927, 1
    %v931 = vperm.slane %v927, 2
    %v932 = vperm.slane %v927, 3
    %v933 = vperm.slane %v927, 4
    %v934 = vperm.slane %v927, 5
    %v935 = vperm.slane %v927, 6
    %v936 = vperm.slane %v927, 7
    %v1009 = vunpack.c.l.b16 %v863
    %v1010 = vunpack.c.h.b16 %v863
    %v1011 = vunpack.c.l.b16 %v864
    %v1012 = vunpack.c.h.b16 %v864
    %v1013 = vunpack.c.l.b16 %v865
    %v1014 = vunpack.c.h.b16 %v865
    %v1015 = vunpack.c.l.b16 %v866
    %v1016 = vunpack.c.h.b16 %v866
    %v1017 = vunpack.c.l.b16 %v867
    %v1018 = vunpack.c.h.b16 %v867
    %v1019 = vunpack.c.l.b16 %v868
    %v1020 = vunpack.c.h.b16 %v868
    %v1021 = vunpack.c.l.b16 %v869
    %v1022 = vunpack.c.h.b16 %v869
    %v1023 = vunpack.c.l.b16 %v870
    %v1024 = vunpack.c.h.b16 %v870
    %v1025 = vunpack.c.l.b16 %v871
    %v1026 = vunpack.c.h.b16 %v871
    %v1027 = vunpack.c.l.b16 %v872
    %v1028 = vunpack.c.h.b16 %v872
    %v1029 = vunpack.c.l.b16 %v873
    %v1030 = vunpack.c.h.b16 %v873
    %v1031 = vunpack.c.l.b16 %v874
    %v1032 = vunpack.c.h.b16 %v874
    %v1033 = vunpack.c.l.b16 %v875
    %v1034 = vunpack.c.h.b16 %v875
    %v1035 = vunpack.c.l.b16 %v876
    %v1036 = vunpack.c.h.b16 %v876
    %v1037 = vunpack.c.l.b16 %v877
    %v1038 = vunpack.c.h.b16 %v877
    %v1039 = vunpack.c.l.b16 %v878
    %v1040 = vunpack.c.h.b16 %v878
    %v1041 = vunpack.c.l.b16 %v879
    %v1042 = vunpack.c.h.b16 %v879
    %v1043 = vunpack.c.l.b16 %v880
    %v1044 = vunpack.c.h.b16 %v880
    %v1045 = vunpack.c.l.b16 %v881
    %v1046 = vunpack.c.h.b16 %v881
    %v1047 = vunpack.c.l.b16 %v882
    %v1048 = vunpack.c.h.b16 %v882
    %v1049 = vunpack.c.l.b16 %v883
    %v1050 = vunpack.c.h.b16 %v883
    %v1051 = vunpack.c.l.b16 %v884
    %v1052 = vunpack.c.h.b16 %v884
    %v1053 = vunpack.c.l.b16 %v885
    %v1054 = vunpack.c.h.b16 %v885
    %v1055 = vunpack.c.l.b16 %v886
    %v1056 = vunpack.c.h.b16 %v886
    %v1057 = vunpack.c.l.b16 %v887
    %v1058 = vunpack.c.h.b16 %v887
    %v1059 = vunpack.c.l.b16 %v888
    %v1060 = vunpack.c.h.b16 %v888
    %v1061 = vunpack.c.l.b16 %v889
    %v1062 = vunpack.c.h.b16 %v889
    %v1063 = vunpack.c.l.b16 %v890
    %v1064 = vunpack.c.h.b16 %v890
    %v1065 = vunpack.c.l.b16 %v891
    %v1066 = vunpack.c.h.b16 %v891
    %v1067 = vunpack.c.l.b16 %v892
    %v1068 = vunpack.c.h.b16 %v892
    %v1069 = vunpack.c.l.b16 %v893
    %v1070 = vunpack.c.h.b16 %v893
    %v1071 = vunpack.c.l.b16 %v894
    %v1072 = vunpack.c.h.b16 %v894
    %v1073 = vunpack.c.l.b16 %v895
    %v1074 = vunpack.c.h.b16 %v895
    %v1075 = vunpack.c.l.b16 %v896
    %v1076 = vunpack.c.h.b16 %v896
    %v1077 = vunpack.c.l.b16 %v897
    %v1078 = vunpack.c.h.b16 %v897
    %v1079 = vunpack.c.l.b16 %v898
    %v1080 = vunpack.c.h.b16 %v898
    %v1081 = vunpack.c.l.b16 %v899
    %v1082 = vunpack.c.h.b16 %v899
    %v1083 = vunpack.c.l.b16 %v900
    %v1084 = vunpack.c.h.b16 %v900
    %v1085 = vunpack.c.l.b16 %v901
    %v1086 = vunpack.c.h.b16 %v901
    %v1087 = vunpack.c.l.b16 %v902
    %v1088 = vunpack.c.h.b16 %v902
    %v1089 = vunpack.c.l.b16 %v903
    %v1090 = vunpack.c.h.b16 %v903
    %v1091 = vunpack.c.l.b16 %v904
    %v1092 = vunpack.c.h.b16 %v904
    %v1093 = vunpack.c.l.b16 %v905
    %v1094 = vunpack.c.h.b16 %v905
    %v1095 = vunpack.c.l.b16 %v906
    %v1096 = vunpack.c.h.b16 %v906
    %v1097 = vunpack.c.l.b16 %v907
    %v1098 = vunpack.c.h.b16 %v907
    %v1099 = vunpack.c.l.b16 %v908
    %v1100 = vunpack.c.h.b16 %v908
    %v1101 = vunpack.c.l.b16 %v909
    %v1102 = vunpack.c.h.b16 %v909
    %v1103 = vunpack.c.l.b16 %v910
    %v1104 = vunpack.c.h.b16 %v910
    %v1105 = vunpack.c.l.b16 %v911
    %v1106 = vunpack.c.h.b16 %v911
    %v1107 = vunpack.c.l.b16 %v912
    %v1108 = vunpack.c.h.b16 %v912
    %v1109 = vunpack.c.l.b16 %v913
    %v1110 = vunpack.c.h.b16 %v913
    %v1111 = vunpack.c.l.b16 %v914
    %v1112 = vunpack.c.h.b16 %v914
    %v1113 = vunpack.c.l.b16 %v915
    %v1114 = vunpack.c.h.b16 %v915
    %v1115 = vunpack.c.l.b16 %v916
    %v1116 = vunpack.c.h.b16 %v916
    %v1117 = vunpack.c.l.b16 %v917
    %v1118 = vunpack.c.h.b16 %v917
    %v1119 = vunpack.c.l.b16 %v918
    %v1120 = vunpack.c.h.b16 %v918
    %v1121 = vunpack.c.l.b16 %v919
    %v1122 = vunpack.c.h.b16 %v919
    %v1123 = vunpack.c.l.b16 %v920
    %v1124 = vunpack.c.h.b16 %v920
    %v1125 = vunpack.c.l.b16 %v921
    %v1126 = vunpack.c.h.b16 %v921
    %v1127 = vunpack.c.l.b16 %v922
    %v1128 = vunpack.c.h.b16 %v922
    %v1129 = vunpack.c.l.b16 %v923
    %v1130 = vunpack.c.h.b16 %v923
    %v1131 = vunpack.c.l.b16 %v924
    %v1132 = vunpack.c.h.b16 %v924
    %v1133 = vunpack.c.l.b16 %v925
    %v1134 = vunpack.c.h.b16 %v925
    %v1135 = vunpack.c.l.b16 %v926
    %v1136 = vunpack.c.h.b16 %v926
    %v1137 = vpack.c.b16 %v1017, %v1009
    %v1138 = vpack.c.b16 %v1018, %v1010
    %v1139 = vpack.c.b16 %v1019, %v1011
    %v1140 = vpack.c.b16 %v1020, %v1012
    %v1141 = vpack.c.b16 %v1021, %v1013
    %v1142 = vpack.c.b16 %v1022, %v1014
    %v1143 = vpack.c.b16 %v1023, %v1015
    %v1144 = vpack.c.b16 %v1024, %v1016
    %v1145 = vpack.c.b16 %v1033, %v1025
    %v1146 = vpack.c.b16 %v1034, %v1026
    %v1147 = vpack.c.b16 %v1035, %v1027
    %v1148 = vpack.c.b16 %v1036, %v1028
    %v1149 = vpack.c.b16 %v1037, %v1029
    %v1150 = vpack.c.b16 %v1038, %v1030
    %v1151 = vpack.c.b16 %v1039, %v1031
    %v1152 = vpack.c.b16 %v1040, %v1032
    %v1153 = vpack.c.b16 %v1049, %v1041
    %v1154 = vpack.c.b16 %v1050, %v1042
    %v1155 = vpack.c.b16 %v1051, %v1043
    %v1156 = vpack.c.b16 %v1052, %v1044
    %v1157 = vpack.c.b16 %v1053, %v1045
    %v1158 = vpack.c.b16 %v1054, %v1046
    %v1159 = vpack.c.b16 %v1055, %v1047
    %v1160 = vpack.c.b16 %v1056, %v1048
    %v1161 = vpack.c.b16 %v1065, %v1057
    %v1162 = vpack.c.b16 %v1066, %v1058
    %v1163 = vpack.c.b16 %v1067, %v1059
    %v1164 = vpack.c.b16 %v1068, %v1060
    %v1165 = vpack.c.b16 %v1069, %v1061
    %v1166 = vpack.c.b16 %v1070, %v1062
    %v1167 = vpack.c.b16 %v1071, %v1063
    %v1168 = vpack.c.b16 %v1072, %v1064
    %v1169 = vpack.c.b16 %v1081, %v1073
    %v1170 = vpack.c.b16 %v1082, %v1074
    %v1171 = vpack.c.b16 %v1083, %v1075
    %v1172 = vpack.c.b16 %v1084, %v1076
    %v1173 = vpack.c.b16 %v1085, %v1077
    %v1174 = vpack.c.b16 %v1086, %v1078
    %v1175 = vpack.c.b16 %v1087, %v1079
    %v1176 = vpack.c.b16 %v1088, %v1080
    %v1177 = vpack.c.b16 %v1097, %v1089
    %v1178 = vpack.c.b16 %v1098, %v1090
    %v1179 = vpack.c.b16 %v1099, %v1091
    %v1180 = vpack.c.b16 %v1100, %v1092
    %v1181 = vpack.c.b16 %v1101, %v1093
    %v1182 = vpack.c.b16 %v1102, %v1094
    %v1183 = vpack.c.b16 %v1103, %v1095
    %v1184 = vpack.c.b16 %v1104, %v1096
    %v1185 = vpack.c.b16 %v1113, %v1105
    %v1186 = vpack.c.b16 %v1114, %v1106
    %v1187 = vpack.c.b16 %v1115, %v1107
    %v1188 = vpack.c.b16 %v1116, %v1108
    %v1189 = vpack.c.b16 %v1117, %v1109
    %v1190 = vpack.c.b16 %v1118, %v1110
    %v1191 = vpack.c.b16 %v1119, %v1111
    %v1192 = vpack.c.b16 %v1120, %v1112
    %v1193 = vpack.c.b16 %v1129, %v1121
    %v1194 = vpack.c.b16 %v1130, %v1122
    %v1195 = vpack.c.b16 %v1131, %v1123
    %v1196 = vpack.c.b16 %v1132, %v1124
    %v1197 = vpack.c.b16 %v1133, %v1125
    %v1198 = vpack.c.b16 %v1134, %v1126
    %v1199 = vpack.c.b16 %v1135, %v1127
    %v1200 = vpack.c.b16 %v1136, %v1128
    %1265 = vmatpush.bf16.msra.mxu0 %v1193
    %1266 = vmatpush.bf16.msra.mxu0 %v1185
    %1267 = vmatpush.bf16.msra.mxu0 %v1177
    %1268 = vmatpush.bf16.msra.mxu0 %v1169
    %1269 = vmatpush.bf16.msra.mxu0 %v1161
    %1270 = vmatpush.bf16.msra.mxu0 %v1153
    %1271 = vmatpush.bf16.msra.mxu0 %v1145
    %1272 = vmatpush.bf16.msra.mxu0 %v1137
    %1273 = vmatmul.bf16.gmra.mxu0 %v862
    %v1274 = vpop.f32.mrf.mxu0
    %v1275 = vadd.f32 %v929, %v1274
    %v1276 = vpop.f32.mrf.mxu0
    %1277 = vdwg.mxu0
    %1278 = vmatpush.bf16.msra.mxu0 %v1194
    %1279 = vmatpush.bf16.msra.mxu0 %v1186
    %1280 = vmatpush.bf16.msra.mxu0 %v1178
    %1281 = vmatpush.bf16.msra.mxu0 %v1170
    %1282 = vmatpush.bf16.msra.mxu0 %v1162
    %1283 = vmatpush.bf16.msra.mxu0 %v1154
    %1284 = vmatpush.bf16.msra.mxu0 %v1146
    %1285 = vmatpush.bf16.msra.mxu0 %v1138
    %1286 = vmatmul.bf16.gmra.mxu0 %v862
    %v1287 = vpop.f32.mrf.mxu0
    %v1288 = vadd.f32 %v930, %v1287
    %v1289 = vpop.f32.mrf.mxu0
    %1290 = vdwg.mxu0
    %1291 = vmatpush.bf16.msra.mxu0 %v1195
    %1292 = vmatpush.bf16.msra.mxu0 %v1187
    %1293 = vmatpush.bf16.msra.mxu0 %v1179
    %1294 = vmatpush.bf16.msra.mxu0 %v1171
    %1295 = vmatpush.bf16.msra.mxu0 %v1163
    %1296 = vmatpush.bf16.msra.mxu0 %v1155
    %1297 = vmatpush.bf16.msra.mxu0 %v1147
    %1298 = vmatpush.bf16.msra.mxu0 %v1139
    %1299 = vmatmul.bf16.gmra.mxu0 %v862
    %v1300 = vpop.f32.mrf.mxu0
    %v1301 = vadd.f32 %v931, %v1300
    %v1302 = vpop.f32.mrf.mxu0
    %1303 = vdwg.mxu0
    %1304 = vmatpush.bf16.msra.mxu0 %v1196
    %1305 = vmatpush.bf16.msra.mxu0 %v1188
    %1306 = vmatpush.bf16.msra.mxu0 %v1180
    %1307 = vmatpush.bf16.msra.mxu0 %v1172
    %1308 = vmatpush.bf16.msra.mxu0 %v1164
    %1309 = vmatpush.bf16.msra.mxu0 %v1156
    %1310 = vmatpush.bf16.msra.mxu0 %v1148
    %1311 = vmatpush.bf16.msra.mxu0 %v1140
    %1312 = vmatmul.bf16.gmra.mxu0 %v862
    %v1313 = vpop.f32.mrf.mxu0
    %v1314 = vadd.f32 %v932, %v1313
    %v1315 = vpop.f32.mrf.mxu0
    %1316 = vdwg.mxu0
    %1317 = vmatpush.bf16.msra.mxu0 %v1197
    %1318 = vmatpush.bf16.msra.mxu0 %v1189
    %1319 = vmatpush.bf16.msra.mxu0 %v1181
    %1320 = vmatpush.bf16.msra.mxu0 %v1173
    %1321 = vmatpush.bf16.msra.mxu0 %v1165
    %1322 = vmatpush.bf16.msra.mxu0 %v1157
    %1323 = vmatpush.bf16.msra.mxu0 %v1149
    %1324 = vmatpush.bf16.msra.mxu0 %v1141
    %1325 = vmatmul.bf16.gmra.mxu0 %v862
    %v1326 = vpop.f32.mrf.mxu0
    %v1327 = vadd.f32 %v933, %v1326
    %v1328 = vpop.f32.mrf.mxu0
    %1329 = vdwg.mxu0
    %1330 = vmatpush.bf16.msra.mxu0 %v1198
    %1331 = vmatpush.bf16.msra.mxu0 %v1190
    %1332 = vmatpush.bf16.msra.mxu0 %v1182
    %1333 = vmatpush.bf16.msra.mxu0 %v1174
    %1334 = vmatpush.bf16.msra.mxu0 %v1166
    %1335 = vmatpush.bf16.msra.mxu0 %v1158
    %1336 = vmatpush.bf16.msra.mxu0 %v1150
    %1337 = vmatpush.bf16.msra.mxu0 %v1142
    %1338 = vmatmul.bf16.gmra.mxu0 %v862
    %v1339 = vpop.f32.mrf.mxu0
    %v1340 = vadd.f32 %v934, %v1339
    %v1341 = vpop.f32.mrf.mxu0
    %1342 = vdwg.mxu0
    %1343 = vmatpush.bf16.msra.mxu0 %v1199
    %1344 = vmatpush.bf16.msra.mxu0 %v1191
    %1345 = vmatpush.bf16.msra.mxu0 %v1183
    %1346 = vmatpush.bf16.msra.mxu0 %v1175
    %1347 = vmatpush.bf16.msra.mxu0 %v1167
    %1348 = vmatpush.bf16.msra.mxu0 %v1159
    %1349 = vmatpush.bf16.msra.mxu0 %v1151
    %1350 = vmatpush.bf16.msra.mxu0 %v1143
    %1351 = vmatmul.bf16.gmra.mxu0 %v862
    %v1352 = vpop.f32.mrf.mxu0
    %v1353 = vadd.f32 %v935, %v1352
    %v1354 = vpop.f32.mrf.mxu0
    %1355 = vdwg.mxu0
    %1356 = vmatpush.bf16.msra.mxu0 %v1200
    %1357 = vmatpush.bf16.msra.mxu0 %v1192
    %1358 = vmatpush.bf16.msra.mxu0 %v1184
    %1359 = vmatpush.bf16.msra.mxu0 %v1176
    %1360 = vmatpush.bf16.msra.mxu0 %v1168
    %1361 = vmatpush.bf16.msra.mxu0 %v1160
    %1362 = vmatpush.bf16.msra.mxu0 %v1152
    %1363 = vmatpush.bf16.msra.mxu0 %v1144
    %1364 = vmatmul.bf16.gmra.mxu0 %v862
    %v1365 = vpop.f32.mrf.mxu0
    %v1366 = vadd.f32 %v936, %v1365
    %v1367 = vpop.f32.mrf.mxu0
    %1368 = vdwg.mxu0
    %v1377 = vrot.slane %v1288, 6
    %v1378 = vrot.slane %v1301, 4
    %v1379 = vrot.slane %v1314, 2
    %v1380 = vrot.slane %v1340, 6
    %v1381 = vrot.slane %v1353, 4
    %v1382 = vrot.slane %v1366, 2
    %vm1383 = vcmask 1041408
    %v1384 = vsel %vm1383, %v1275, %v1377
    %vm1385 = vcmask 1045508
    %v1386 = vsel %vm1385, %v1378, %v1379
    %vm1387 = vcmask 1043456
    %v1388 = vsel %vm1387, %v1384, %v1386
    %v1389 = vsel %vm1383, %v1327, %v1380
    %v1390 = vsel %vm1385, %v1381, %v1382
    %v1391 = vsel %vm1387, %v1389, %v1390
    %vm1392 = vcmask 1043458
    %v1393 = vsel %vm1392, %v1275, %v1377
    %vm1394 = vcmask 1045504
    %v1395 = vsel %vm1394, %v1379, %v1378
    %vm1396 = vcmask 1045506
    %v1397 = vsel %vm1396, %v1393, %v1395
    %v1398 = vrot.slane %v1397, 2
    %v1399 = vsel %vm1392, %v1327, %v1380
    %v1400 = vsel %vm1394, %v1382, %v1381
    %v1401 = vsel %vm1396, %v1399, %v1400
    %v1402 = vrot.slane %v1401, 2
    %v1403 = vsel %vm1385, %v1275, %v1377
    %v1404 = vsel %vm1383, %v1378, %v1379
    %v1405 = vsel %vm1387, %v1404, %v1403
    %v1406 = vrot.slane %v1405, 4
    %v1407 = vsel %vm1385, %v1327, %v1380
    %v1408 = vsel %vm1383, %v1381, %v1382
    %v1409 = vsel %vm1387, %v1408, %v1407
    %v1410 = vrot.slane %v1409, 4
    %v1411 = vsel %vm1394, %v1377, %v1275
    %v1412 = vsel %vm1392, %v1378, %v1379
    %v1413 = vsel %vm1396, %v1412, %v1411
    %v1414 = vrot.slane %v1413, 6
    %v1415 = vsel %vm1394, %v1380, %v1327
    %v1416 = vsel %vm1392, %v1381, %v1382
    %v1417 = vsel %vm1396, %v1416, %v1415
    %v1418 = vrot.slane %v1417, 6
    %1427 = vst [vmem:[#allocation11] sm:$0xff] %v1388
    %1428 = vst [vmem:[#allocation11 + $0x8] sm:$0xff] %v1391
    %1429 = vst [vmem:[#allocation11 + $0x10] sm:$0xff] %v1398
    %1430 = vst [vmem:[#allocation11 + $0x18] sm:$0xff] %v1402
    %1431 = vst [vmem:[#allocation11 + $0x20] sm:$0xff] %v1406
    %1432 = vst [vmem:[#allocation11 + $0x28] sm:$0xff] %v1410
    %1433 = vst [vmem:[#allocation11 + $0x30] sm:$0xff] %v1414
    %1434 = vst [vmem:[#allocation11 + $0x38] sm:$0xff] %v1418
    // Predicated region
    $region50: #{tpu_custom_call.1} parent=1 // pred_check
      _
    $region51: #{tpu_custom_call.1} parent=1 // pred_check_branch
      %1436 = sbr.rel (0) target = $region53
    $region52: #{tpu_custom_call.1} parent=1 // pred_region
      %1438 = vsyncadd [#allocation4], 768
      %s1439 = sshll.u32 [#allocation11], 4
      %s1440 = int_to_ptr.vmem [resolvable:$true] %s1439
      %s1441 = sshll.u32 %s7, 4
      %s1442 = int_to_ptr.hbm [resolvable:$true] %s1441
      %1447 = dma.vmem_to_hbm [thread:$0]  %s1440, 256, %s1442, [#allocation4], 256, 256, 16
    $region53: #{tpu_custom_call.1} parent=1 // pred_fallthru
      _
    // Predicated region
    $region54: #{tpu_custom_call.1} parent=1 // pred_check
      _
    $region55: #{tpu_custom_call.1} parent=1 // pred_check_branch
      %1449 = sbr.rel (0) target = $region57
    $region56: #{tpu_custom_call.1} parent=1 // pred_region
      %1451 = dma.done [#allocation4], 1024
    $region57: #{tpu_custom_call.1} parent=1 // pred_fallthru
      _
    %1452 = vsyncpa [#allocation3], 1
    %1453 = vsyncpa [#allocation6], 1
    %1454 = vsyncpa [#allocation9], 1
    %1455 = vsyncpa [#allocation4], 1

</llo_original>
